<compile_context>
chip_gen: v6e
topology: v6e:2x2x1
jax: 0.10.0
libtpu: 0.0.40
codegen_flags: <defaults>
</compile_context>

<pallas_src>
import math

import jax
import jax.numpy as jnp
from jax import lax
from jax.experimental import pallas as pl
from jax.experimental.pallas import tpu as pltpu

_MXU_DTYPE = jnp.bfloat16   # matmul operands; accumulation stays f32
_LANE = 128


def _round_up(x, m):
    return ((x + m - 1) // m) * m


def _vmem_limit_bytes():
    # v5e/v6e: 128 MiB VMEM per core; v7x: 64 MiB. Gate the scoped limit on the
    # actual capacity, leaving headroom for compiler-internal scratch.
    try:
        cap = int(pltpu.get_tpu_info().vmem_capacity_bytes)
    except Exception:
        cap = 64 * 1024 * 1024          # conservative fallback (v7x-sized)
    return max(32 * 1024 * 1024, min(cap * 3 // 4, 96 * 1024 * 1024))


def _choose_grid(B, N, E, F_in, Dp, vmem_limit_bytes):
    """Pick (graphs_per_step G, grid step count).

    Pack as many graphs per grid step as fit a conservative VMEM budget (amortizes
    per-step overhead and widens the flattened weight matmuls), but keep the step
    count even (>=2) when B >= 2 so v7x's two TensorCores are both load-balanced.
    """
    f32 = 4
    per_graph = f32 * (
        2 * (N * F_in + N * E + N * Dp + E * Dp)   # double-buffered pipeline IO
        + 4 * N * E                                # adj, e, a_row, a_col
        + 2 * N * Dp + 3 * E * Dp                  # xf, node_att, edge, edge_t, edge_out
    )
    budget = max(vmem_limit_bytes // 2, 4 * 1024 * 1024)
    steps = 2 if B >= 2 else 1
    G = pl.cdiv(B, steps)
    while G > 1 and G * per_graph > budget:
        steps += 2 if B >= 2 else 1
        G = pl.cdiv(B, steps)
    return int(G), int(steps)


def hgat_kernel(x_ref, adj_ref, w_ref, w3_ref, node_out_ref, edge_out_ref):
    # Per-step views: x [G, N, F_in] f32, adj [G, N, E] f32,
    # w [F_in, Dp] bf16, w3 [Dp, Dp] bf16 (pre-cast in the wrapper).
    G, N, F_in = x_ref.shape
    E = adj_ref.shape[2]
    contract0 = (((0,), (0,)), ((), ()))   # A^T @ B without materializing A^T

    w = w_ref[...]
    w3 = w3_ref[...]

    # ---- node_features @ weight, flattened over the G packed graphs ---------
    # One (G*N, F_in) x (F_in, Dp) MXU pass instead of G skinny ones.
    x2d = x_ref[...].reshape(G * N, F_in).astype(_MXU_DTYPE)
    xf2d = jnp.dot(x2d, w, preferred_element_type=jnp.float32)        # [G*N, Dp] f32

    # ---- both softmaxes from ONE exp pass (shift-invariant) -----------------
    adj = adj_ref[...]                                                 # f32
    m = jnp.max(jnp.max(adj, axis=2, keepdims=True), axis=1, keepdims=True)  # [G,1,1]
    e = jnp.exp(adj - m)                                               # [G,N,E]
    inv_row = pl.reciprocal(jnp.sum(e, axis=2, keepdims=True), approx=True)  # [G,N,1]
    inv_col = pl.reciprocal(jnp.sum(e, axis=1, keepdims=True), approx=True)  # [G,1,E]
    a_row_bf = (e * inv_row).astype(_MXU_DTYPE)   # softmax(adj, dim=-1)
    a_col_bf = (e * inv_col).astype(_MXU_DTYPE)   # softmax(adj.T, dim=1), untransposed
    # (a_col cast hoisted: reused by both A^T mixes below.)

    # ---- edge_embeddings = relu(A^T @ xf) per graph (dropout = identity) ----
    edges = []
    for g in range(G):   # static unroll; wrapper caps G via the VMEM budget
        xf_g = xf2d[g * N:(g + 1) * N].astype(_MXU_DTYPE)
        edge_g = lax.dot_general(a_col_bf[g], xf_g, contract0,
                                 preferred_element_type=jnp.float32)   # [E, Dp]
        edges.append(jnp.maximum(edge_g, 0.0))

    # ---- edge @ weight3, flattened over graphs: (G*E, Dp) x (Dp, Dp) --------
    edge2d = jnp.concatenate(edges, axis=0) if G > 1 else edges[0]
    edge_t2d = jnp.dot(edge2d.astype(_MXU_DTYPE), w3,
                       preferred_element_type=jnp.float32)             # [G*E, Dp] f32

    # ---- node attention + edge output per graph -----------------------------
    for g in range(G):
        edge_t_g = edge_t2d[g * E:(g + 1) * E].astype(_MXU_DTYPE)
        # node_attention = relu(A @ edge_transformed)   (concat=True)
        node_g = jnp.dot(a_row_bf[g], edge_t_g, preferred_element_type=jnp.float32)
        node_g = jnp.maximum(node_g, 0.0)                              # [N, Dp]
        # edge_output = relu(A^T @ node_attention)      (use_edge=True)
        edge_out_g = lax.dot_general(a_col_bf[g], node_g.astype(_MXU_DTYPE),
                                     contract0, preferred_element_type=jnp.float32)
        node_out_ref[g] = node_g.astype(node_out_ref.dtype)
        edge_out_ref[g] = jnp.maximum(edge_out_g, 0.0).astype(edge_out_ref.dtype)


def hgat_forward(node_features, adjacency_matrix, root_embeddings, weight, weight3):
    """Batched HGATLayer forward (eval mode: dropout = identity).

    node_features:    [B, N, F_in]
    adjacency_matrix: [B, N, E]
    root_embeddings:  accepted for signature parity; unused by HGATLayer.forward
    weight:           [F_in, D]
    weight3:          [D, D]
    Returns (node_attention_embeddings [B, N, D], edge_output [B, E, D]).
    """
    del root_embeddings
    B, N, F_in = node_features.shape
    E = adjacency_matrix.shape[2]
    D = weight.shape[1]

    # Lane-dense outputs: pad the feature dim to a multiple of 128 (zero columns
    # stay zero through every matmul/relu) and slice the padding off afterwards.
    Dp = _round_up(max(D, _LANE), _LANE)
    # Pre-cast constant weights to bf16 once (no per-grid-step f32->bf16 repack,
    # half the weight VMEM + DMA bytes).
    w_pad = jnp.pad(weight.astype(jnp.float32), ((0, 0), (0, Dp - D))).astype(_MXU_DTYPE)
    w3_pad = jnp.pad(weight3.astype(jnp.float32),
                     ((0, Dp - D), (0, Dp - D))).astype(_MXU_DTYPE)

    vmem_limit = _vmem_limit_bytes()
    G, steps = _choose_grid(B, N, E, F_in, Dp, vmem_limit)
    B_pad = G * steps
    if B_pad != B:
        # Zero-pad the batch; padded graphs are independent (per-graph softmax max)
        # and their outputs are sliced off below.
        node_features = jnp.pad(node_features, ((0, B_pad - B), (0, 0), (0, 0)))
        adjacency_matrix = jnp.pad(adjacency_matrix, ((0, B_pad - B), (0, 0), (0, 0)))

    grid_spec = pltpu.PrefetchScalarGridSpec(
        num_scalar_prefetch=0,
        grid=(steps,),                       # G graphs per grid step
        in_specs=[
            pl.BlockSpec((G, N, F_in), lambda s: (s, 0, 0)),
            pl.BlockSpec((G, N, E), lambda s: (s, 0, 0)),
            pl.BlockSpec((F_in, Dp), lambda s: (0, 0)),   # shared weights
            pl.BlockSpec((Dp, Dp), lambda s: (0, 0)),
        ],
        out_specs=(
            pl.BlockSpec((G, N, Dp), lambda s: (s, 0, 0)),
            pl.BlockSpec((G, E, Dp), lambda s: (s, 0, 0)),
        ),
    )

    node_out, edge_out = pl.pallas_call(
        hgat_kernel,
        out_shape=(
            jax.ShapeDtypeStruct((B_pad, N, Dp), jnp.float32),
            jax.ShapeDtypeStruct((B_pad, E, Dp), jnp.float32),
        ),
        grid_spec=grid_spec,
        compiler_params=pltpu.CompilerParams(
            dimension_semantics=("parallel",),   # shards the (even) step count on v7x
            vmem_limit_bytes=vmem_limit,
        ),
    )(node_features.astype(jnp.float32), adjacency_matrix.astype(jnp.float32),
      w_pad, w3_pad)

    return node_out[:B, :, :D], edge_out[:B, :, :D]


def hgat_reference(node_features, adjacency_matrix, weight, weight3):
    """Pure-JAX (f32) reference of the eval-mode forward, batched over graphs."""
    xf = jnp.einsum('gnf,fd->gnd', node_features, weight)
    a_row = jax.nn.softmax(adjacency_matrix, axis=-1)          # softmax(adj, dim=1)
    a_col = jax.nn.softmax(adjacency_matrix, axis=-2)          # softmax(adj.T, dim=1)^T
    edge = jax.nn.relu(jnp.einsum('gne,gnd->ged', a_col, xf))
    edge_t = jnp.einsum('ged,df->gef', edge, weight3)
    node_att = jax.nn.relu(jnp.einsum('gne,ged->gnd', a_row, edge_t))
    edge_out = jax.nn.relu(jnp.einsum('gne,gnd->ged', a_col, node_att))
    return node_att, edge_out


if __name__ == "__main__":
    # Small shapes consistent with the module: B graphs, N nodes, E (hyper)edges.
    B, N, E = 2, 8, 8
    input_dim, output_dim = 16, 32

    key = jax.random.PRNGKey(0)
    k_x, k_adj, k_root, k_w, k_w3 = jax.random.split(key, 5)

    node_features = jax.random.normal(k_x, (B, N, input_dim), dtype=jnp.float32)
    adjacency_matrix = jax.random.normal(k_adj, (B, N, E), dtype=jnp.float32)
    root_embeddings = jax.random.normal(k_root, (B, N, output_dim), dtype=jnp.float32)

    # Deterministic parameter init matching reset_parameters():
    # uniform(-stdv, stdv) with stdv = 1/sqrt(output_dim). transfer=True -> weight
    # used; weight2 exists in the module but is unused on this path. bias=False.
    stdv = 1.0 / math.sqrt(output_dim)
    weight = jax.random.uniform(
        k_w, (input_dim, output_dim), minval=-stdv, maxval=stdv, dtype=jnp.float32)
    weight3 = jax.random.uniform(
        k_w3, (output_dim, output_dim), minval=-stdv, maxval=stdv, dtype=jnp.float32)

    # TODO(synk): F.dropout with training=True (stochastic masking) is omitted;
    # this kernel implements the deterministic eval-mode forward.
    node_att, edge_out = hgat_forward(
        node_features, adjacency_matrix, root_embeddings, weight, weight3)
    jax.block_until_ready((node_att, edge_out))

    assert node_att.shape == (B, N, output_dim)
    assert edge_out.shape == (B, E, output_dim)

    # Correctness vs. pure-f32 reference (loose tolerance: bf16 MXU operands and
    # approximate softmax reciprocals give ~1e-2 relative deviation by design).
    ref_node, ref_edge = hgat_reference(node_features, adjacency_matrix, weight, weight3)
    assert bool(jnp.allclose(node_att, ref_node, rtol=5e-2, atol=3e-2))
    assert bool(jnp.allclose(edge_out, ref_edge, rtol=5e-2, atol=3e-2))

    print("KERNEL_OK")
</pallas_src>

<mosaic_0001>
module attributes {stable_mosaic.version = 11 : i64} {
  func.func @hgat_kernel(%arg0: i32, %arg1: memref<1x8x16xf32, #tpu.memory_space<vmem>>, %arg2: memref<1x8x8xf32, #tpu.memory_space<vmem>>, %arg3: memref<16x128xbf16, #tpu.memory_space<vmem>>, %arg4: memref<128x128xbf16, #tpu.memory_space<vmem>>, %arg5: memref<1x8x128xf32, #tpu.memory_space<vmem>>, %arg6: memref<1x8x128xf32, #tpu.memory_space<vmem>>) attributes {dimension_semantics = [#tpu.dimension_semantics<parallel>], iteration_bounds = array<i64: 2>, scalar_prefetch = 0 : i64, scratch_operands = 0 : i64, tpu.core_type = #tpu.core_type<tc>, window_params = [{transform_indices = @transform_0, window_bounds = array<i64: 1, 8, 16>}, {transform_indices = @transform_1, window_bounds = array<i64: 1, 8, 8>}, {pipeline_mode = #tpu.pipeline_mode<synchronous>, transform_indices = @transform_2, window_bounds = array<i64: 16, 128>}, {pipeline_mode = #tpu.pipeline_mode<synchronous>, transform_indices = @transform_3, window_bounds = array<i64: 128, 128>}, {transform_indices = @transform_4, window_bounds = array<i64: 1, 8, 128>}, {transform_indices = @transform_5, window_bounds = array<i64: 1, 8, 128>}]} {
    %c0 = arith.constant 0 : index
    %c0_0 = arith.constant 0 : index
    %0 = vector.load %arg3[%c0, %c0_0] : memref<16x128xbf16, #tpu.memory_space<vmem>>, vector<16x128xbf16>
    %c0_1 = arith.constant 0 : index
    %c0_2 = arith.constant 0 : index
    %1 = vector.load %arg4[%c0_1, %c0_2] : memref<128x128xbf16, #tpu.memory_space<vmem>>, vector<128x128xbf16>
    %c0_3 = arith.constant 0 : index
    %c0_4 = arith.constant 0 : index
    %c0_5 = arith.constant 0 : index
    %2 = vector.load %arg1[%c0_3, %c0_4, %c0_5] : memref<1x8x16xf32, #tpu.memory_space<vmem>>, vector<1x8x16xf32>
    %3 = vector.shape_cast %2 : vector<1x8x16xf32> to vector<8x16xf32>
    %4 = arith.truncf %3 : vector<8x16xf32> to vector<8x16xbf16>
    %cst = arith.constant dense<0.000000e+00> : vector<8x128xf32>
    %5 = tpu.matmul %4, %0, %cst {dimension_numbers = #tpu.dot_dimension_numbers<[1], [0], [0], [1], [0, 0, 1, 1], [], []>} : vector<8x16xbf16>, vector<16x128xbf16>, vector<8x128xf32> -> vector<8x128xf32>
    %c0_6 = arith.constant 0 : index
    %c0_7 = arith.constant 0 : index
    %c0_8 = arith.constant 0 : index
    %6 = vector.load %arg2[%c0_6, %c0_7, %c0_8] : memref<1x8x8xf32, #tpu.memory_space<vmem>>, vector<1x8x8xf32>
    %cst_9 = arith.constant dense<0xFF800000> : vector<1x8xf32>
    %7 = vector.multi_reduction <maximumf>, %6, %cst_9 [2] : vector<1x8x8xf32> to vector<1x8xf32>
    %8 = vector.shape_cast %7 : vector<1x8xf32> to vector<1x8x1xf32>
    %cst_10 = arith.constant dense<0xFF800000> : vector<1x1xf32>
    %9 = vector.multi_reduction <maximumf>, %8, %cst_10 [1] : vector<1x8x1xf32> to vector<1x1xf32>
    %10 = vector.shape_cast %9 : vector<1x1xf32> to vector<1x1x1xf32>
    %11 = vector.broadcast %10 : vector<1x1x1xf32> to vector<1x8x8xf32>
    %12 = arith.subf %6, %11 : vector<1x8x8xf32>
    %13 = math.exp %12 : vector<1x8x8xf32>
    %cst_11 = arith.constant dense<0.000000e+00> : vector<1x8xf32>
    %14 = vector.multi_reduction <add>, %13, %cst_11 [2] : vector<1x8x8xf32> to vector<1x8xf32>
    %15 = vector.shape_cast %14 : vector<1x8xf32> to vector<1x8x1xf32>
    %16 = tpu.reciprocal %15 {approx = true} : vector<1x8x1xf32> -> vector<1x8x1xf32>
    %cst_12 = arith.constant dense<0.000000e+00> : vector<1x8xf32>
    %17 = vector.multi_reduction <add>, %13, %cst_12 [1] : vector<1x8x8xf32> to vector<1x8xf32>
    %18 = vector.shape_cast %17 : vector<1x8xf32> to vector<1x1x8xf32>
    %19 = tpu.reciprocal %18 {approx = true} : vector<1x1x8xf32> -> vector<1x1x8xf32>
    %20 = vector.broadcast %16 : vector<1x8x1xf32> to vector<1x8x8xf32>
    %21 = arith.mulf %13, %20 : vector<1x8x8xf32>
    %22 = arith.truncf %21 : vector<1x8x8xf32> to vector<1x8x8xbf16>
    %23 = vector.broadcast %19 : vector<1x1x8xf32> to vector<1x8x8xf32>
    %24 = arith.mulf %13, %23 : vector<1x8x8xf32>
    %25 = arith.truncf %24 : vector<1x8x8xf32> to vector<1x8x8xbf16>
    %26 = arith.truncf %5 : vector<8x128xf32> to vector<8x128xbf16>
    %27 = vector.shape_cast %25 : vector<1x8x8xbf16> to vector<8x8xbf16>
    %cst_13 = arith.constant dense<0.000000e+00> : vector<8x128xf32>
    %28 = tpu.matmul %27, %26, %cst_13 {dimension_numbers = #tpu.dot_dimension_numbers<[0], [0], [1], [1], [0, 1, 1, 1], [], []>} : vector<8x8xbf16>, vector<8x128xbf16>, vector<8x128xf32> -> vector<8x128xf32>
    %cst_14 = arith.constant 0.000000e+00 : f32
    %29 = vector.broadcast %cst_14 : f32 to vector<8x128xf32>
    %30 = arith.maximumf %28, %29 : vector<8x128xf32>
    %31 = arith.truncf %30 : vector<8x128xf32> to vector<8x128xbf16>
    %cst_15 = arith.constant dense<0.000000e+00> : vector<8x128xf32>
    %32 = tpu.matmul %31, %1, %cst_15 {dimension_numbers = #tpu.dot_dimension_numbers<[1], [0], [0], [1], [0, 0, 1, 1], [], []>} : vector<8x128xbf16>, vector<128x128xbf16>, vector<8x128xf32> -> vector<8x128xf32>
    %33 = arith.truncf %32 : vector<8x128xf32> to vector<8x128xbf16>
    %34 = vector.shape_cast %22 : vector<1x8x8xbf16> to vector<8x8xbf16>
    %cst_16 = arith.constant dense<0.000000e+00> : vector<8x128xf32>
    %35 = tpu.matmul %34, %33, %cst_16 {dimension_numbers = #tpu.dot_dimension_numbers<[1], [0], [0], [1], [0, 0, 1, 1], [], []>} : vector<8x8xbf16>, vector<8x128xbf16>, vector<8x128xf32> -> vector<8x128xf32>
    %cst_17 = arith.constant 0.000000e+00 : f32
    %36 = vector.broadcast %cst_17 : f32 to vector<8x128xf32>
    %37 = arith.maximumf %35, %36 : vector<8x128xf32>
    %38 = vector.shape_cast %25 : vector<1x8x8xbf16> to vector<8x8xbf16>
    %39 = arith.truncf %37 : vector<8x128xf32> to vector<8x128xbf16>
    %cst_18 = arith.constant dense<0.000000e+00> : vector<8x128xf32>
    %40 = tpu.matmul %38, %39, %cst_18 {dimension_numbers = #tpu.dot_dimension_numbers<[0], [0], [1], [1], [0, 1, 1, 1], [], []>} : vector<8x8xbf16>, vector<8x128xbf16>, vector<8x128xf32> -> vector<8x128xf32>
    %c0_19 = arith.constant 0 : index
    %c0_20 = arith.constant 0 : index
    %c0_21 = arith.constant 0 : index
    %41 = vector.load %arg5[%c0_19, %c0_20, %c0_21] : memref<1x8x128xf32, #tpu.memory_space<vmem>>, vector<1x8x128xf32>
    %42 = vector.shape_cast %41 : vector<1x8x128xf32> to vector<8x128xf32>
    %43 = vector.shape_cast %37 : vector<8x128xf32> to vector<1x8x128xf32>
    tpu.vector_store %arg5[%c0_19, %c0_20, %c0_21], %43 {strides = array<i32>} : memref<1x8x128xf32, #tpu.memory_space<vmem>>, vector<1x8x128xf32>,
    %cst_22 = arith.constant 0.000000e+00 : f32
    %44 = vector.broadcast %cst_22 : f32 to vector<8x128xf32>
    %45 = arith.maximumf %40, %44 : vector<8x128xf32>
    %c0_23 = arith.constant 0 : index
    %c0_24 = arith.constant 0 : index
    %c0_25 = arith.constant 0 : index
    %46 = vector.load %arg6[%c0_23, %c0_24, %c0_25] : memref<1x8x128xf32, #tpu.memory_space<vmem>>, vector<1x8x128xf32>
    %47 = vector.shape_cast %46 : vector<1x8x128xf32> to vector<8x128xf32>
    %48 = vector.shape_cast %45 : vector<8x128xf32> to vector<1x8x128xf32>
    tpu.vector_store %arg6[%c0_23, %c0_24, %c0_25], %48 {strides = array<i32>} : memref<1x8x128xf32, #tpu.memory_space<vmem>>, vector<1x8x128xf32>,
    return
  }
  func.func @transform_0(%arg0: i32) -> (i32, i32, i32) {
    %c0_i32 = arith.constant 0 : i32
    %c0_i32_0 = arith.constant 0 : i32
    %c0_i32_1 = arith.constant 0 : i32
    return %arg0, %c0_i32, %c0_i32_0 : i32, i32, i32
  }
  func.func @transform_1(%arg0: i32) -> (i32, i32, i32) {
    %c0_i32 = arith.constant 0 : i32
    %c0_i32_0 = arith.constant 0 : i32
    %c0_i32_1 = arith.constant 0 : i32
    return %arg0, %c0_i32, %c0_i32_0 : i32, i32, i32
  }
  func.func @transform_2(%arg0: i32) -> (i32, i32) {
    %c0_i32 = arith.constant 0 : i32
    %c0_i32_0 = arith.constant 0 : i32
    %c0_i32_1 = arith.constant 0 : i32
    return %c0_i32, %c0_i32_0 : i32, i32
  }
  func.func @transform_3(%arg0: i32) -> (i32, i32) {
    %c0_i32 = arith.constant 0 : i32
    %c0_i32_0 = arith.constant 0 : i32
    %c0_i32_1 = arith.constant 0 : i32
    return %c0_i32, %c0_i32_0 : i32, i32
  }
  func.func @transform_4(%arg0: i32) -> (i32, i32, i32) {
    %c0_i32 = arith.constant 0 : i32
    %c0_i32_0 = arith.constant 0 : i32
    %c0_i32_1 = arith.constant 0 : i32
    return %arg0, %c0_i32, %c0_i32_0 : i32, i32, i32
  }
  func.func @transform_5(%arg0: i32) -> (i32, i32, i32) {
    %c0_i32 = arith.constant 0 : i32
    %c0_i32_0 = arith.constant 0 : i32
    %c0_i32_1 = arith.constant 0 : i32
    return %arg0, %c0_i32, %c0_i32_0 : i32, i32, i32
  }
}

</mosaic_0001>

<llo_original>
// kernel: tpu_custom_call.1
$region0: #{tpu_custom_call.1}
  #allocation0 [shape = 'u32[]', space=smem, size = 0x4, offset = 0x4, fixed_abs, tag = 'smem constant byte address 0x4 - core index']
  #allocation1 [shape = 'u32[144,128]{1,0:T(1,128)}', space=vmem, size = 0x12000, scoped, tag = 'internal scratch']
  %s0 = inlined_call_operand.hbm [shape: f32[2,8,16], index: 0, kind: input, shape index: {}]
  %s1 = inlined_call_operand.hbm [shape: f32[2,8,8], index: 1, kind: input, shape index: {}]
  %s2 = inlined_call_operand.hbm [shape: bf16[16,128], index: 2, kind: input, shape index: {}]
  %s3 = inlined_call_operand.hbm [shape: bf16[128,128], index: 3, kind: input, shape index: {}]
  %s4 = inlined_call_operand.hbm [shape: f32[2,8,128], index: 4, kind: output, shape index: {0}]
  %s5 = inlined_call_operand.hbm [shape: f32[2,8,128], index: 5, kind: output, shape index: {1}]
  %6 = xla_tuple %s4, %s5
  %s7 = sld [smem:[#allocation0]]
  $region73: #{tpu_custom_call.1} parent=0
    _
  %s9 = ssub.s32 1, %s7
  %s10 = scalar_select 0, %s9, %s7
  $region1: #{tpu_custom_call.1} parent=0
    #allocation2 [shape = 'u8[8192]{0}', space=vmem, size = 0x2000, scoped, tag = 'input window, operand 0']
    #allocation3 [shape = 's32[2]{0}', space=sflag, size = 0x8, scoped, tag = 'scoped memory for tpu_custom_call.1']
    #allocation4 [shape = 's32[2]{0}', space=sflag, size = 0x8, scoped, tag = 'scoped memory for tpu_custom_call.1']
    #allocation5 [shape = 'u8[8192]{0}', space=vmem, size = 0x2000, scoped, tag = 'input window, operand 1']
    #allocation6 [shape = 's32[2]{0}', space=sflag, size = 0x8, scoped, tag = 'scoped memory for tpu_custom_call.1']
    #allocation7 [shape = 'u8[4096]{0}', space=vmem, size = 0x1000, scoped, tag = 'input window, operand 2, single buffered']
    #allocation8 [shape = 'u8[32768]{0}', space=vmem, size = 0x8000, scoped, tag = 'input window, operand 3, single buffered']
    #allocation9 [shape = 's32[1]{0}', space=sflag, size = 0x4, scoped, tag = 'scoped memory for tpu_custom_call.1']
    #allocation10 [shape = 'u8[8192]{0}', space=vmem, size = 0x2000, scoped, tag = 'output window, operand 0']
    #allocation11 [shape = 'u8[8192]{0}', space=vmem, size = 0x2000, scoped, tag = 'output window, operand 1']
    #allocation12 [shape = 's32[2]{0}', space=sflag, size = 0x8, scoped, tag = 'scoped memory for tpu_custom_call.1']
    %11 = vsyncpa [#allocation3], 0
    %s12 = scalar_lea.sflag [#allocation3], 1
    %13 = vsyncpa %s12, 0
    %14 = vsyncpa [#allocation6], 0
    %s15 = scalar_lea.sflag [#allocation6], 1
    %16 = vsyncpa %s15, 0
    %17 = vsyncpa [#allocation9], 0
    %18 = vsyncpa [#allocation4], 0
    %s19 = scalar_lea.sflag [#allocation4], 1
    %20 = vsyncpa %s19, 0
    %21 = vsyncpa [#allocation12], 0
    %s22 = scalar_lea.sflag [#allocation12], 1
    %23 = vsyncpa %s22, 0
    loop: start=0, step=1, limit=4
    $region2: #{tpu_custom_call.1} parent=1 // loop_pre_header
      _
    $region3: #{tpu_custom_call.1} parent=1 // loop_header
      %s25 = sphi 0, %s29
      %p26 = scmp.ge.s32.totalorder %s25, 4
      %s35 = sphi 0, %s37
      %s38 = sphi 0, %s35
      %s39 = sphi 0, %s38
      %s55 = sphi 0, %s39
      %s61 = sphi 0, %s63
      %s64 = sphi 0, %s61
      %s65 = sphi 0, %s64
      %s81 = sphi 0, %s65
      %s85 = sphi 0, %s85
      %s87 = sphi 0, %s85
      %s88 = sphi 0, %s87
      %s102 = sphi 0, %s88
      %s106 = sphi 0, %s106
      %s108 = sphi 0, %s106
      %s109 = sphi 0, %s108
      %s123 = sphi 0, %s109
      %s129 = sphi 0, %s131
      %s132 = sphi 0, %s129
      %s133 = sphi 0, %s132
      %s149 = sphi 0, %s133
      %s155 = sphi 0, %s157
      %s158 = sphi 0, %s155
      %s159 = sphi 0, %s158
      %s175 = sphi 0, %s159
    $region4: #{tpu_custom_call.1} parent=1 // loop_header_branch
      %28 = sbr.rel (%p26) target = $region8
    $region5: #{tpu_custom_call.1} parent=1 // loop_body
      %s30 = ssub.s32 %s25, 1
      %s31 = ssub.s32 %s25, 2
      %s32 = sadd.s32 %s25, 1
      %s33 = ssub.s32 %s25, %s32
      %p34 = scmp.eq.s32.totalorder %s33, 0
      %s36 = sadd.s32 %s35, 1
      %s37 = scalar_select %p34, %s35, %s36
      %p40 = pneg %p34
      %p41 = scmp.eq.s32.totalorder %s25, 1
      %p42 = por %p40, %p41
      %p43 = scmp.ne.s32.totalorder %s35, %s38
      %p44 = scmp.eq.s32.totalorder %s25, 0
      %p45 = por %p43, %p44
      %p46 = scmp.ne.s32.totalorder %s35, %s38
      %p47 = scmp.eq.s32.totalorder %s30, 1
      %p48 = por %p46, %p47
      %p49 = scmp.ne.s32.totalorder %s38, %s39
      %p50 = scmp.eq.s32.totalorder %s30, 0
      %p51 = por %p49, %p50
      %p52 = scmp.ne.s32.totalorder %s38, %s39
      %p53 = scmp.eq.s32.totalorder %s31, 1
      %p54 = por %p52, %p53
      %p56 = scmp.ne.s32.totalorder %s39, %s55
      %p57 = scmp.eq.s32.totalorder %s31, 0
      %p58 = por %p56, %p57
      %s59 = ssub.s32 %s25, %s32
      %p60 = scmp.eq.s32.totalorder %s59, 0
      %s62 = sadd.s32 %s61, 1
      %s63 = scalar_select %p60, %s61, %s62
      %p66 = pneg %p60
      %p67 = scmp.eq.s32.totalorder %s25, 1
      %p68 = por %p66, %p67
      %p69 = scmp.ne.s32.totalorder %s61, %s64
      %p70 = scmp.eq.s32.totalorder %s25, 0
      %p71 = por %p69, %p70
      %p72 = scmp.ne.s32.totalorder %s61, %s64
      %p73 = scmp.eq.s32.totalorder %s30, 1
      %p74 = por %p72, %p73
      %p75 = scmp.ne.s32.totalorder %s64, %s65
      %p76 = scmp.eq.s32.totalorder %s30, 0
      %p77 = por %p75, %p76
      %p78 = scmp.ne.s32.totalorder %s64, %s65
      %p79 = scmp.eq.s32.totalorder %s31, 1
      %p80 = por %p78, %p79
      %p82 = scmp.ne.s32.totalorder %s65, %s81
      %p83 = scmp.eq.s32.totalorder %s31, 0
      %p84 = por %p82, %p83
      %s86 = sadd.s32 %s85, 1
      %p89 = scmp.eq.s32.totalorder %s25, 1
      %p90 = scmp.ne.s32.totalorder %s85, %s87
      %p91 = scmp.eq.s32.totalorder %s25, 0
      %p92 = por %p90, %p91
      %p93 = scmp.ne.s32.totalorder %s85, %s87
      %p94 = scmp.eq.s32.totalorder %s30, 1
      %p95 = por %p93, %p94
      %p96 = scmp.ne.s32.totalorder %s87, %s88
      %p97 = scmp.eq.s32.totalorder %s30, 0
      %p98 = por %p96, %p97
      %p99 = scmp.ne.s32.totalorder %s87, %s88
      %p100 = scmp.eq.s32.totalorder %s31, 1
      %p101 = por %p99, %p100
      %p103 = scmp.ne.s32.totalorder %s88, %s102
      %p104 = scmp.eq.s32.totalorder %s31, 0
      %p105 = por %p103, %p104
      %s107 = sadd.s32 %s106, 1
      %p110 = scmp.eq.s32.totalorder %s25, 1
      %p111 = scmp.ne.s32.totalorder %s106, %s108
      %p112 = scmp.eq.s32.totalorder %s25, 0
      %p113 = por %p111, %p112
      %p114 = scmp.ne.s32.totalorder %s106, %s108
      %p115 = scmp.eq.s32.totalorder %s30, 1
      %p116 = por %p114, %p115
      %p117 = scmp.ne.s32.totalorder %s108, %s109
      %p118 = scmp.eq.s32.totalorder %s30, 0
      %p119 = por %p117, %p118
      %p120 = scmp.ne.s32.totalorder %s108, %s109
      %p121 = scmp.eq.s32.totalorder %s31, 1
      %p122 = por %p120, %p121
      %p124 = scmp.ne.s32.totalorder %s109, %s123
      %p125 = scmp.eq.s32.totalorder %s31, 0
      %p126 = por %p124, %p125
      %s127 = ssub.s32 %s25, %s32
      %p128 = scmp.eq.s32.totalorder %s127, 0
      %s130 = sadd.s32 %s129, 1
      %s131 = scalar_select %p128, %s129, %s130
      %p134 = pneg %p128
      %p135 = scmp.eq.s32.totalorder %s25, 1
      %p136 = por %p134, %p135
      %p137 = scmp.ne.s32.totalorder %s129, %s132
      %p138 = scmp.eq.s32.totalorder %s25, 0
      %p139 = por %p137, %p138
      %p140 = scmp.ne.s32.totalorder %s129, %s132
      %p141 = scmp.eq.s32.totalorder %s30, 1
      %p142 = por %p140, %p141
      %p143 = scmp.ne.s32.totalorder %s132, %s133
      %p144 = scmp.eq.s32.totalorder %s30, 0
      %p145 = por %p143, %p144
      %p146 = scmp.ne.s32.totalorder %s132, %s133
      %p147 = scmp.eq.s32.totalorder %s31, 1
      %p148 = por %p146, %p147
      %p150 = scmp.ne.s32.totalorder %s133, %s149
      %p151 = scmp.eq.s32.totalorder %s31, 0
      %p152 = por %p150, %p151
      %s153 = ssub.s32 %s25, %s32
      %p154 = scmp.eq.s32.totalorder %s153, 0
      %s156 = sadd.s32 %s155, 1
      %s157 = scalar_select %p154, %s155, %s156
      %p160 = pneg %p154
      %p161 = scmp.eq.s32.totalorder %s25, 1
      %p162 = por %p160, %p161
      %p163 = scmp.ne.s32.totalorder %s155, %s158
      %p164 = scmp.eq.s32.totalorder %s25, 0
      %p165 = por %p163, %p164
      %p166 = scmp.ne.s32.totalorder %s155, %s158
      %p167 = scmp.eq.s32.totalorder %s30, 1
      %p168 = por %p166, %p167
      %p169 = scmp.ne.s32.totalorder %s158, %s159
      %p170 = scmp.eq.s32.totalorder %s30, 0
      %p171 = por %p169, %p170
      %p172 = scmp.ne.s32.totalorder %s158, %s159
      %p173 = scmp.eq.s32.totalorder %s31, 1
      %p174 = por %p172, %p173
      %p176 = scmp.ne.s32.totalorder %s159, %s175
      %p177 = scmp.eq.s32.totalorder %s31, 0
      %p178 = por %p176, %p177
      %p179 = scmp.le.s32.totalorder 1, %s25
      %p180 = scmp.lt.s32.totalorder %s25, 3
      %p181 = pnand %p179, %p180
      %p182 = pneg %p181
      // Predicated region
      $region9: #{tpu_custom_call.1} parent=5 // pred_check
        _
      $region10: #{tpu_custom_call.1} parent=5 // pred_check_branch
        %184 = sbr.rel (%p181) target = $region12
      $region11: #{tpu_custom_call.1} parent=5 // pred_region
        %s185 = ssub.s32 %s25, 1
        // Predicated region
        $region13: #{tpu_custom_call.1} parent=11 // pred_check
          %p186 = pneg %p98
        $region14: #{tpu_custom_call.1} parent=11 // pred_check_branch
          %188 = sbr.rel (%p186) target = $region16
        $region15: #{tpu_custom_call.1} parent=11 // pred_region
          %s190 = ssub.s32 128, 128
          %191 = vsyncadd [#allocation6], %s190
          %s192 = sshll.u32 [#allocation7], 4
          %s193 = int_to_ptr.vmem [resolvable:$true] %s192
          %198 = dma.hbm_to_vmem [thread:$0]  %s2, 128, %s193, [#allocation6], 64, 64, 4
        $region16: #{tpu_custom_call.1} parent=11 // pred_fallthru
          _
        // Predicated region
        $region17: #{tpu_custom_call.1} parent=11 // pred_check
          %p199 = pneg %p119
        $region18: #{tpu_custom_call.1} parent=11 // pred_check_branch
          %201 = sbr.rel (%p199) target = $region20
        $region19: #{tpu_custom_call.1} parent=11 // pred_region
          %s203 = ssub.s32 1024, 1024
          %204 = vsyncadd [#allocation9], %s203
          %s205 = sshll.u32 [#allocation8], 4
          %s206 = int_to_ptr.vmem [resolvable:$true] %s205
          %211 = dma.hbm_to_vmem [thread:$0]  %s3, 1024, %s206, [#allocation9], 64, 64, 4
        $region20: #{tpu_custom_call.1} parent=11 // pred_fallthru
          _
      $region12: #{tpu_custom_call.1} parent=5 // pred_fallthru
        _
      %p212 = scmp.lt.s32.totalorder %s25, 2
      // Predicated region
      $region21: #{tpu_custom_call.1} parent=5 // pred_check
        %p213 = pneg %p212
      $region22: #{tpu_custom_call.1} parent=5 // pred_check_branch
        %215 = sbr.rel (%p213) target = $region24
      $region23: #{tpu_custom_call.1} parent=5 // pred_region
        // Predicated region
        $region25: #{tpu_custom_call.1} parent=23 // pred_check
          %p216 = pneg %p45
        $region26: #{tpu_custom_call.1} parent=23 // pred_check_branch
          %218 = sbr.rel (%p216) target = $region28
        $region27: #{tpu_custom_call.1} parent=23 // pred_region
          %s219 = sand.u32 %s35, 1
          %s220 = scalar_lea.sflag [#allocation3], %s219
          %s221 = sand.u32 %s35, 1
          %s222 = smul.addr %s221, 8
          %s223 = scalar_lea.vmem [#allocation2], %s222
          %s225 = ssub.s32 128, 128
          %226 = vsyncadd %s220, %s225
          %s227 = smul.addr %s25, 128
          %s228 = scalar_lea.hbm %s0, %s227
          %s230 = sshll.u32 %s223, 4
          %s231 = int_to_ptr.vmem [resolvable:$true] %s230
          %233 = dma.hbm_to_vmem [thread:$0]  %s228, 128, %s231, %s220
        $region28: #{tpu_custom_call.1} parent=23 // pred_fallthru
          _
        // Predicated region
        $region29: #{tpu_custom_call.1} parent=23 // pred_check
          %p234 = pneg %p71
        $region30: #{tpu_custom_call.1} parent=23 // pred_check_branch
          %236 = sbr.rel (%p234) target = $region32
        $region31: #{tpu_custom_call.1} parent=23 // pred_region
          %s237 = sand.u32 %s25, 1
          %s238 = scalar_lea.sflag [#allocation6], %s237
          %s239 = sand.u32 %s61, 1
          %s240 = smul.addr %s239, 8
          %s241 = scalar_lea.vmem [#allocation5], %s240
          %s243 = ssub.s32 128, 128
          %244 = vsyncadd %s238, %s243
          %s245 = smul.addr %s25, 128
          %s246 = scalar_lea.hbm %s1, %s245
          %s248 = sshll.u32 %s241, 4
          %s249 = int_to_ptr.vmem [resolvable:$true] %s248
          %251 = dma.hbm_to_vmem [thread:$0]  %s246, 128, %s249, %s238
        $region32: #{tpu_custom_call.1} parent=23 // pred_fallthru
          _
      $region24: #{tpu_custom_call.1} parent=5 // pred_fallthru
        _
      %p252 = scmp.le.s32.totalorder 1, %s25
      %p253 = scmp.lt.s32.totalorder %s25, 3
      %p254 = pnand %p252, %p253
      %p255 = pneg %p254
      // Predicated region
      $region33: #{tpu_custom_call.1} parent=5 // pred_check
        _
      $region34: #{tpu_custom_call.1} parent=5 // pred_check_branch
        %257 = sbr.rel (%p254) target = $region36
      $region35: #{tpu_custom_call.1} parent=5 // pred_region
        %s258 = ssub.s32 %s25, 1
        %s259 = sand.u32 %s38, 1
        %s260 = scalar_lea.sflag [#allocation3], %s259
        %s261 = sand.u32 %s38, 1
        %s262 = smul.addr %s261, 8
        %s263 = scalar_lea.vmem [#allocation2], %s262
        // Predicated region
        $region37: #{tpu_custom_call.1} parent=35 // pred_check
          %p264 = pneg %p51
        $region38: #{tpu_custom_call.1} parent=35 // pred_check_branch
          %266 = sbr.rel (%p264) target = $region40
        $region39: #{tpu_custom_call.1} parent=35 // pred_region
          %267 = dma.done %s260, 128
        $region40: #{tpu_custom_call.1} parent=35 // pred_fallthru
          _
        %s268 = sand.u32 %s30, 1
        %s269 = scalar_lea.sflag [#allocation6], %s268
        %s270 = sand.u32 %s64, 1
        %s271 = smul.addr %s270, 8
        %s272 = scalar_lea.vmem [#allocation5], %s271
        // Predicated region
        $region41: #{tpu_custom_call.1} parent=35 // pred_check
          %p273 = pneg %p77
        $region42: #{tpu_custom_call.1} parent=35 // pred_check_branch
          %275 = sbr.rel (%p273) target = $region44
        $region43: #{tpu_custom_call.1} parent=35 // pred_region
          %276 = dma.done %s269, 128
        $region44: #{tpu_custom_call.1} parent=35 // pred_fallthru
          _
        // Predicated region
        $region45: #{tpu_custom_call.1} parent=35 // pred_check
          %p277 = pneg %p98
        $region46: #{tpu_custom_call.1} parent=35 // pred_check_branch
          %279 = sbr.rel (%p277) target = $region48
        $region47: #{tpu_custom_call.1} parent=35 // pred_region
          %280 = dma.done [#allocation6], 128
        $region48: #{tpu_custom_call.1} parent=35 // pred_fallthru
          _
        // Predicated region
        $region49: #{tpu_custom_call.1} parent=35 // pred_check
          %p281 = pneg %p119
        $region50: #{tpu_custom_call.1} parent=35 // pred_check_branch
          %283 = sbr.rel (%p281) target = $region52
        $region51: #{tpu_custom_call.1} parent=35 // pred_region
          %284 = dma.done [#allocation9], 1024
        $region52: #{tpu_custom_call.1} parent=35 // pred_fallthru
          _
        %s285 = sand.u32 %s38, 1
        %s286 = scalar_lea.sflag [#allocation3], %s285
        %s287 = sand.u32 %s38, 1
        %s288 = smul.addr %s287, 8
        %s289 = scalar_lea.vmem [#allocation2], %s288
        %p290 = pneg %p51
        %p291 = pneg %p48
        %s292 = sand.u32 %s30, 1
        %s293 = scalar_lea.sflag [#allocation6], %s292
        %s294 = sand.u32 %s64, 1
        %s295 = smul.addr %s294, 8
        %s296 = scalar_lea.vmem [#allocation5], %s295
        %p297 = pneg %p77
        %p298 = pneg %p74
        %p299 = pneg %p98
        %p300 = pneg %p95
        %p301 = pneg %p119
        %p302 = pneg %p116
        %p303 = pneg %p145
        %p304 = pneg %p142
        %s305 = sand.u32 %s132, 1
        %s306 = scalar_lea.sflag [#allocation4], %s305
        %s307 = sand.u32 %s132, 1
        %s308 = smul.addr %s307, 8
        %s309 = scalar_lea.vmem [#allocation10], %s308
        %p310 = pneg %p171
        %p311 = pneg %p168
        %s312 = sand.u32 %s158, 1
        %s313 = scalar_lea.sflag [#allocation12], %s312
        %s314 = sand.u32 %s158, 1
        %s315 = smul.addr %s314, 8
        %s316 = scalar_lea.vmem [#allocation11], %s315
        %v318 = vld [vmem:[#allocation7] sm:$0xf]
        %v319 = vld [vmem:[#allocation7 + $0x4] sm:$0xf]
        %v320 = vld [vmem:[#allocation8] sm:$0xf]
        %v321 = vld [vmem:[#allocation8 + $0x4] sm:$0xf]
        %v322 = vld [vmem:[#allocation8 + $0x8] sm:$0xf]
        %v323 = vld [vmem:[#allocation8 + $0xc] sm:$0xf]
        %v324 = vld [vmem:[#allocation8 + $0x10] sm:$0xf]
        %v325 = vld [vmem:[#allocation8 + $0x14] sm:$0xf]
        %v326 = vld [vmem:[#allocation8 + $0x18] sm:$0xf]
        %v327 = vld [vmem:[#allocation8 + $0x1c] sm:$0xf]
        %v328 = vld [vmem:[#allocation8 + $0x20] sm:$0xf]
        %v329 = vld [vmem:[#allocation8 + $0x24] sm:$0xf]
        %v330 = vld [vmem:[#allocation8 + $0x28] sm:$0xf]
        %v331 = vld [vmem:[#allocation8 + $0x2c] sm:$0xf]
        %v332 = vld [vmem:[#allocation8 + $0x30] sm:$0xf]
        %v333 = vld [vmem:[#allocation8 + $0x34] sm:$0xf]
        %v334 = vld [vmem:[#allocation8 + $0x38] sm:$0xf]
        %v335 = vld [vmem:[#allocation8 + $0x3c] sm:$0xf]
        %v336 = vld [vmem:[%s263] sm:$0xff]
        %v337 = vpack.c.bf16 %v336, %v336
        %v340 = vunpack.c.l.b16 %v318
        %v341 = vunpack.c.l.b16 %v319
        %v342 = vpack.c.b16 %v341, %v340
        %vm344 = vcmask 130048
        %v346 = vsel %vm344, %v337, 0
        %348 = vmatprep.subr.bf16.mxu0 0
        %349 = vmatpush1.bf16.msra.mxu0 0
        %350 = vmatprep.subr.bf16.mxu0 0
        %351 = vmatpush1.bf16.msra.mxu0 0
        %352 = vmatprep.subr.bf16.mxu0 0
        %353 = vmatpush1.bf16.msra.mxu0 0
        %354 = vmatprep.subr.bf16.mxu0 0
        %355 = vmatpush1.bf16.msra.mxu0 0
        %356 = vmatprep.subr.bf16.mxu0 0
        %357 = vmatpush1.bf16.msra.mxu0 0
        %358 = vmatprep.subr.bf16.mxu0 0
        %359 = vmatpush1.bf16.msra.mxu0 0
        %360 = vmatprep.subr.bf16.mxu0 0
        %361 = vmatpush1.bf16.msra.mxu0 0
        %362 = vmatprep.subr.bf16.mxu0 0
        %363 = vmatpush1.bf16.msra.mxu0 %v342
        %364 = vmatprep.subr.bf16.mxu0 0
        %365 = vmatpush2.bf16.msra.mxu0 0
        %366 = vmatprep.subr.bf16.mxu0 0
        %367 = vmatpush2.bf16.msra.mxu0 0
        %368 = vmatprep.subr.bf16.mxu0 0
        %369 = vmatpush2.bf16.msra.mxu0 0
        %370 = vmatprep.subr.bf16.mxu0 0
        %371 = vmatpush2.bf16.msra.mxu0 0
        %372 = vmatprep.subr.bf16.mxu0 0
        %373 = vmatpush2.bf16.msra.mxu0 0
        %374 = vmatprep.subr.bf16.mxu0 0
        %375 = vmatpush2.bf16.msra.mxu0 0
        %376 = vmatprep.subr.bf16.mxu0 0
        %377 = vmatpush2.bf16.msra.mxu0 0
        %378 = vmatprep.subr.bf16.mxu0 0
        %379 = vmatpush2.bf16.msra.mxu0 0
        %380 = vmatprep.mubr.bf16.mxu0 0
        %381 = vmatmul.mubr.bf16.gmra.mxu0 %v346
        %v382 = vpop.f32.mrf.mxu0
        %v383 = vadd.f32 0.0, %v382
        %v384 = vpop.f32.mrf.mxu0
        %v385 = vpop.f32.mrf.mxu0
        %v386 = vpop.f32.mrf.mxu0
        %387 = vdwg.mxu0
        %v388 = vld [vmem:[%s272] sm:$0xff]
        %vm389 = vcmask 64512
        %v390 = vsel %vm389, %v388, -inf
        %391 = vmax.xlane.f32.xlu0 %v390
        %v392 = vpop.xlane.xlu0 %391
        %v393 = vrot.slane %v392, 4
        %v394 = vmax.f32 %v392, %v393
        %v395 = vrot.slane %v394, 2
        %v396 = vmax.f32 %v394, %v395
        %v397 = vrot.slane %v396, 1
        %v398 = vmax.f32 %v396, %v397
        %v399 = vsub.f32 %v388, %v398
        %v400 = vmul.f32 %v399, 1.442695
        %v401 = vpow.pop %v400
        %v402 = vsel %vm389, %v401, 0.0
        %403 = vadd.xlane.f32.xlu0 %v402
        %v404 = vpop.xlane.xlu0 %403
        %v405 = vrcp.pop %v404
        %v406 = vrot.slane %v402, 4
        %v407 = vadd.f32 %v402, %v406
        %v408 = vrot.slane %v407, 2
        %v409 = vadd.f32 %v407, %v408
        %v410 = vrot.slane %v409, 1
        %v411 = vadd.f32 %v409, %v410
        %v412 = vrcp.pop %v411
        %v413 = vmul.f32 %v401, %v405
        %v414 = vpack.c.bf16 %v413, %v413
        %v415 = vmul.f32 %v401, %v412
        %v416 = vpack.c.bf16 %v415, %v415
        %v417 = vpack.c.bf16 %v383, %v383
        %418 = vxpose.xlu0.c.b16.start [1/8] %v416, 128
        %419 = vxpose.xlu0.c.b16.cont [2/8] 0, 128
        %420 = vxpose.xlu0.c.b16.cont [3/8] 0, 128
        %421 = vxpose.xlu0.c.b16.cont [4/8] 0, 128
        %422 = vxpose.xlu0.c.b16.cont [5/8] 0, 128
        %423 = vxpose.xlu0.c.b16.cont [6/8] 0, 128
        %424 = vxpose.xlu0.c.b16.cont [7/8] 0, 128
        %425 = vxpose.xlu0.c.b16.end [8/8] 0, 128
        %v426 = vpop.trf.xlu0
        %v427 = vpop.trf.xlu0
        %v428 = vpop.trf.xlu0
        %v429 = vpop.trf.xlu0
        %v430 = vpop.trf.xlu0
        %v431 = vpop.trf.xlu0
        %v432 = vpop.trf.xlu0
        %v433 = vpop.trf.xlu0
        %v435 = vsel %vm389, %v426, 0
        %vm437 = vcmask 1043456
        %v439 = vsel %vm437, %v417, 0
        %441 = vmatprep.subr.bf16.mxu0 0
        %442 = vmatpush1.bf16.msra.mxu0 0
        %443 = vmatprep.subr.bf16.mxu0 0
        %444 = vmatpush1.bf16.msra.mxu0 0
        %445 = vmatprep.subr.bf16.mxu0 0
        %446 = vmatpush1.bf16.msra.mxu0 0
        %447 = vmatprep.subr.bf16.mxu0 0
        %448 = vmatpush1.bf16.msra.mxu0 0
        %449 = vmatprep.subr.bf16.mxu0 0
        %450 = vmatpush1.bf16.msra.mxu0 0
        %451 = vmatprep.subr.bf16.mxu0 0
        %452 = vmatpush1.bf16.msra.mxu0 0
        %453 = vmatprep.subr.bf16.mxu0 0
        %454 = vmatpush1.bf16.msra.mxu0 0
        %455 = vmatprep.subr.bf16.mxu0 0
        %456 = vmatpush1.bf16.msra.mxu0 %v439
        %457 = vmatprep.subr.bf16.mxu0 0
        %458 = vmatpush2.bf16.msra.mxu0 0
        %459 = vmatprep.subr.bf16.mxu0 0
        %460 = vmatpush2.bf16.msra.mxu0 0
        %461 = vmatprep.subr.bf16.mxu0 0
        %462 = vmatpush2.bf16.msra.mxu0 0
        %463 = vmatprep.subr.bf16.mxu0 0
        %464 = vmatpush2.bf16.msra.mxu0 0
        %465 = vmatprep.subr.bf16.mxu0 0
        %466 = vmatpush2.bf16.msra.mxu0 0
        %467 = vmatprep.subr.bf16.mxu0 0
        %468 = vmatpush2.bf16.msra.mxu0 0
        %469 = vmatprep.subr.bf16.mxu0 0
        %470 = vmatpush2.bf16.msra.mxu0 0
        %471 = vmatprep.subr.bf16.mxu0 0
        %472 = vmatpush2.bf16.msra.mxu0 0
        %473 = vmatprep.mubr.bf16.mxu0 0
        %474 = vmatmul.mubr.bf16.gmra.mxu0 %v435
        %v475 = vpop.f32.mrf.mxu0
        %v476 = vadd.f32 0.0, %v475
        %v477 = vpop.f32.mrf.mxu0
        %v478 = vpop.f32.mrf.mxu0
        %v479 = vpop.f32.mrf.mxu0
        %480 = vdwg.mxu0
        %v481 = vmax.f32 %v476, 0.0
        %v482 = vpack.c.bf16 %v481, %v481
        %v499 = vunpack.c.l.b16 %v320
        %v500 = vunpack.c.l.b16 %v321
        %v501 = vunpack.c.l.b16 %v322
        %v502 = vunpack.c.l.b16 %v323
        %v503 = vunpack.c.l.b16 %v324
        %v504 = vunpack.c.l.b16 %v325
        %v505 = vunpack.c.l.b16 %v326
        %v506 = vunpack.c.l.b16 %v327
        %v507 = vunpack.c.l.b16 %v328
        %v508 = vunpack.c.l.b16 %v329
        %v509 = vunpack.c.l.b16 %v330
        %v510 = vunpack.c.l.b16 %v331
        %v511 = vunpack.c.l.b16 %v332
        %v512 = vunpack.c.l.b16 %v333
        %v513 = vunpack.c.l.b16 %v334
        %v514 = vunpack.c.l.b16 %v335
        %v515 = vpack.c.b16 %v500, %v499
        %v516 = vpack.c.b16 %v502, %v501
        %v517 = vpack.c.b16 %v504, %v503
        %v518 = vpack.c.b16 %v506, %v505
        %v519 = vpack.c.b16 %v508, %v507
        %v520 = vpack.c.b16 %v510, %v509
        %v521 = vpack.c.b16 %v512, %v511
        %v522 = vpack.c.b16 %v514, %v513
        %531 = vmatprep.subr.bf16.mxu0 0
        %532 = vmatpush1.bf16.msra.mxu0 %v522
        %533 = vmatprep.subr.bf16.mxu0 0
        %534 = vmatpush1.bf16.msra.mxu0 %v521
        %535 = vmatprep.subr.bf16.mxu0 0
        %536 = vmatpush1.bf16.msra.mxu0 %v520
        %537 = vmatprep.subr.bf16.mxu0 0
        %538 = vmatpush1.bf16.msra.mxu0 %v519
        %539 = vmatprep.subr.bf16.mxu0 0
        %540 = vmatpush1.bf16.msra.mxu0 %v518
        %541 = vmatprep.subr.bf16.mxu0 0
        %542 = vmatpush1.bf16.msra.mxu0 %v517
        %543 = vmatprep.subr.bf16.mxu0 0
        %544 = vmatpush1.bf16.msra.mxu0 %v516
        %545 = vmatprep.subr.bf16.mxu0 0
        %546 = vmatpush1.bf16.msra.mxu0 %v515
        %547 = vmatprep.subr.bf16.mxu0 0
        %548 = vmatpush2.bf16.msra.mxu0 0
        %549 = vmatprep.subr.bf16.mxu0 0
        %550 = vmatpush2.bf16.msra.mxu0 0
        %551 = vmatprep.subr.bf16.mxu0 0
        %552 = vmatpush2.bf16.msra.mxu0 0
        %553 = vmatprep.subr.bf16.mxu0 0
        %554 = vmatpush2.bf16.msra.mxu0 0
        %555 = vmatprep.subr.bf16.mxu0 0
        %556 = vmatpush2.bf16.msra.mxu0 0
        %557 = vmatprep.subr.bf16.mxu0 0
        %558 = vmatpush2.bf16.msra.mxu0 0
        %559 = vmatprep.subr.bf16.mxu0 0
        %560 = vmatpush2.bf16.msra.mxu0 0
        %561 = vmatprep.subr.bf16.mxu0 0
        %562 = vmatpush2.bf16.msra.mxu0 0
        %563 = vmatprep.mubr.bf16.mxu0 0
        %564 = vmatmul.mubr.bf16.gmra.mxu0 %v482
        %v565 = vpop.f32.mrf.mxu0
        %v566 = vadd.f32 0.0, %v565
        %v567 = vpop.f32.mrf.mxu0
        %v568 = vpop.f32.mrf.mxu0
        %v569 = vpop.f32.mrf.mxu0
        %570 = vdwg.mxu0
        %v571 = vpack.c.bf16 %v566, %v566
        %v573 = vsel %vm389, %v414, 0
        %v576 = vsel %vm437, %v571, 0
        %578 = vmatprep.subr.bf16.mxu0 0
        %579 = vmatpush1.bf16.msra.mxu0 0
        %580 = vmatprep.subr.bf16.mxu0 0
        %581 = vmatpush1.bf16.msra.mxu0 0
        %582 = vmatprep.subr.bf16.mxu0 0
        %583 = vmatpush1.bf16.msra.mxu0 0
        %584 = vmatprep.subr.bf16.mxu0 0
        %585 = vmatpush1.bf16.msra.mxu0 0
        %586 = vmatprep.subr.bf16.mxu0 0
        %587 = vmatpush1.bf16.msra.mxu0 0
        %588 = vmatprep.subr.bf16.mxu0 0
        %589 = vmatpush1.bf16.msra.mxu0 0
        %590 = vmatprep.subr.bf16.mxu0 0
        %591 = vmatpush1.bf16.msra.mxu0 0
        %592 = vmatprep.subr.bf16.mxu0 0
        %593 = vmatpush1.bf16.msra.mxu0 %v576
        %594 = vmatprep.subr.bf16.mxu0 0
        %595 = vmatpush2.bf16.msra.mxu0 0
        %596 = vmatprep.subr.bf16.mxu0 0
        %597 = vmatpush2.bf16.msra.mxu0 0
        %598 = vmatprep.subr.bf16.mxu0 0
        %599 = vmatpush2.bf16.msra.mxu0 0
        %600 = vmatprep.subr.bf16.mxu0 0
        %601 = vmatpush2.bf16.msra.mxu0 0
        %602 = vmatprep.subr.bf16.mxu0 0
        %603 = vmatpush2.bf16.msra.mxu0 0
        %604 = vmatprep.subr.bf16.mxu0 0
        %605 = vmatpush2.bf16.msra.mxu0 0
        %606 = vmatprep.subr.bf16.mxu0 0
        %607 = vmatpush2.bf16.msra.mxu0 0
        %608 = vmatprep.subr.bf16.mxu0 0
        %609 = vmatpush2.bf16.msra.mxu0 0
        %610 = vmatprep.mubr.bf16.mxu0 0
        %611 = vmatmul.mubr.bf16.gmra.mxu0 %v573
        %v612 = vpop.f32.mrf.mxu0
        %v613 = vadd.f32 0.0, %v612
        %v614 = vpop.f32.mrf.mxu0
        %v615 = vpop.f32.mrf.mxu0
        %v616 = vpop.f32.mrf.mxu0
        %617 = vdwg.mxu0
        %v618 = vmax.f32 %v613, 0.0
        %v619 = vpack.c.bf16 %v618, %v618
        %v621 = vsel %vm437, %v619, 0
        %623 = vmatprep.subr.bf16.mxu0 0
        %624 = vmatpush1.bf16.msra.mxu0 0
        %625 = vmatprep.subr.bf16.mxu0 0
        %626 = vmatpush1.bf16.msra.mxu0 0
        %627 = vmatprep.subr.bf16.mxu0 0
        %628 = vmatpush1.bf16.msra.mxu0 0
        %629 = vmatprep.subr.bf16.mxu0 0
        %630 = vmatpush1.bf16.msra.mxu0 0
        %631 = vmatprep.subr.bf16.mxu0 0
        %632 = vmatpush1.bf16.msra.mxu0 0
        %633 = vmatprep.subr.bf16.mxu0 0
        %634 = vmatpush1.bf16.msra.mxu0 0
        %635 = vmatprep.subr.bf16.mxu0 0
        %636 = vmatpush1.bf16.msra.mxu0 0
        %637 = vmatprep.subr.bf16.mxu0 0
        %638 = vmatpush1.bf16.msra.mxu0 %v621
        %639 = vmatprep.subr.bf16.mxu0 0
        %640 = vmatpush2.bf16.msra.mxu0 0
        %641 = vmatprep.subr.bf16.mxu0 0
        %642 = vmatpush2.bf16.msra.mxu0 0
        %643 = vmatprep.subr.bf16.mxu0 0
        %644 = vmatpush2.bf16.msra.mxu0 0
        %645 = vmatprep.subr.bf16.mxu0 0
        %646 = vmatpush2.bf16.msra.mxu0 0
        %647 = vmatprep.subr.bf16.mxu0 0
        %648 = vmatpush2.bf16.msra.mxu0 0
        %649 = vmatprep.subr.bf16.mxu0 0
        %650 = vmatpush2.bf16.msra.mxu0 0
        %651 = vmatprep.subr.bf16.mxu0 0
        %652 = vmatpush2.bf16.msra.mxu0 0
        %653 = vmatprep.subr.bf16.mxu0 0
        %654 = vmatpush2.bf16.msra.mxu0 0
        %655 = vmatprep.mubr.bf16.mxu0 0
        %656 = vmatmul.mubr.bf16.gmra.mxu0 %v435
        %v657 = vpop.f32.mrf.mxu0
        %v658 = vadd.f32 0.0, %v657
        %v659 = vpop.f32.mrf.mxu0
        %v660 = vpop.f32.mrf.mxu0
        %v661 = vpop.f32.mrf.mxu0
        %662 = vdwg.mxu0
        %663 = vst [vmem:[%s309] sm:$0xff] %v618
        %v664 = vmax.f32 %v658, 0.0
        %665 = vst [vmem:[%s316] sm:$0xff] %v664
        %s666 = sand.u32 %s132, 1
        %s667 = scalar_lea.sflag [#allocation4], %s666
        %s668 = sand.u32 %s132, 1
        %s669 = smul.addr %s668, 8
        %s670 = scalar_lea.vmem [#allocation10], %s669
        %s671 = sand.u32 %s158, 1
        %s672 = scalar_lea.sflag [#allocation12], %s671
        %s673 = sand.u32 %s158, 1
        %s674 = smul.addr %s673, 8
        %s675 = scalar_lea.vmem [#allocation11], %s674
        // Predicated region
        $region53: #{tpu_custom_call.1} parent=35 // pred_check
          %p676 = pneg %p142
        $region54: #{tpu_custom_call.1} parent=35 // pred_check_branch
          %678 = sbr.rel (%p676) target = $region56
        $region55: #{tpu_custom_call.1} parent=35 // pred_region
          %s680 = ssub.s32 128, 128
          %681 = vsyncadd %s667, %s680
          %s682 = smul.addr %s30, 128
          %s683 = scalar_lea.hbm %s4, %s682
          %s685 = sshll.u32 %s670, 4
          %s686 = int_to_ptr.vmem [resolvable:$true] %s685
          %688 = dma.vmem_to_hbm [thread:$0]  %s686, 128, %s683, %s667
        $region56: #{tpu_custom_call.1} parent=35 // pred_fallthru
          _
        // Predicated region
        $region57: #{tpu_custom_call.1} parent=35 // pred_check
          %p689 = pneg %p168
        $region58: #{tpu_custom_call.1} parent=35 // pred_check_branch
          %691 = sbr.rel (%p689) target = $region60
        $region59: #{tpu_custom_call.1} parent=35 // pred_region
          %s693 = ssub.s32 128, 128
          %694 = vsyncadd %s672, %s693
          %s695 = smul.addr %s30, 128
          %s696 = scalar_lea.hbm %s5, %s695
          %s698 = sshll.u32 %s675, 4
          %s699 = int_to_ptr.vmem [resolvable:$true] %s698
          %701 = dma.vmem_to_hbm [thread:$0]  %s699, 128, %s696, %s672
        $region60: #{tpu_custom_call.1} parent=35 // pred_fallthru
          _
      $region36: #{tpu_custom_call.1} parent=5 // pred_fallthru
        _
      %p702 = scmp.le.s32.totalorder 2, %s25
      // Predicated region
      $region61: #{tpu_custom_call.1} parent=5 // pred_check
        %p703 = pneg %p702
      $region62: #{tpu_custom_call.1} parent=5 // pred_check_branch
        %705 = sbr.rel (%p703) target = $region64
      $region63: #{tpu_custom_call.1} parent=5 // pred_region
        %s706 = ssub.s32 %s25, 2
        // Predicated region
        $region65: #{tpu_custom_call.1} parent=63 // pred_check
          %p707 = pneg %p148
        $region66: #{tpu_custom_call.1} parent=63 // pred_check_branch
          %709 = sbr.rel (%p707) target = $region68
        $region67: #{tpu_custom_call.1} parent=63 // pred_region
          %s710 = sand.u32 %s133, 1
          %s711 = scalar_lea.sflag [#allocation4], %s710
          %s712 = sand.u32 %s133, 1
          %s713 = smul.addr %s712, 8
          %s714 = scalar_lea.vmem [#allocation10], %s713
          %715 = dma.done %s711, 128
        $region68: #{tpu_custom_call.1} parent=63 // pred_fallthru
          _
        // Predicated region
        $region69: #{tpu_custom_call.1} parent=63 // pred_check
          %p716 = pneg %p174
        $region70: #{tpu_custom_call.1} parent=63 // pred_check_branch
          %718 = sbr.rel (%p716) target = $region72
        $region71: #{tpu_custom_call.1} parent=63 // pred_region
          %s719 = sand.u32 %s159, 1
          %s720 = scalar_lea.sflag [#allocation12], %s719
          %s721 = sand.u32 %s159, 1
          %s722 = smul.addr %s721, 8
          %s723 = scalar_lea.vmem [#allocation11], %s722
          %724 = dma.done %s720, 128
        $region72: #{tpu_custom_call.1} parent=63 // pred_fallthru
          _
      $region64: #{tpu_custom_call.1} parent=5 // pred_fallthru
        _
    $region6: #{tpu_custom_call.1} parent=1 // loop_footer
      %s29 = sadd.s32 1, %s25
    $region7: #{tpu_custom_call.1} parent=1 // loop_footer_branch
      %24 = sbr.rel target = $region3
    $region8: #{tpu_custom_call.1} parent=1 // loop_exit
      _
    %725 = vsyncpa [#allocation3], 1
    %s726 = scalar_lea.sflag [#allocation3], 1
    %727 = vsyncpa %s726, 1
    %728 = vsyncpa [#allocation6], 1
    %s729 = scalar_lea.sflag [#allocation6], 1
    %730 = vsyncpa %s729, 1
    %731 = vsyncpa [#allocation9], 1
    %732 = vsyncpa [#allocation4], 1
    %s733 = scalar_lea.sflag [#allocation4], 1
    %734 = vsyncpa %s733, 1
    %735 = vsyncpa [#allocation12], 1
    %s736 = scalar_lea.sflag [#allocation12], 1
    %737 = vsyncpa %s736, 1

</llo_original>
